<compile_context>
chip_gen: v6e
topology: v6e:2x2x1
jax: 0.10.0
libtpu: 0.0.40
codegen_flags: <defaults>
</compile_context>

<pallas_src>
import functools

import jax
import jax.numpy as jnp
from jax.experimental import pallas as pl
from jax.experimental.pallas import tpu as pltpu


def _round_up(a: int, b: int) -> int:
    return ((a + b - 1) // b) * b


def _vmem_config():
    """(vmem_limit_bytes, per-tile VMEM budget) derived from the actual chip.

    v5e/v6e: 128 MiB VMEM -> limit ~96 MiB, tile budget 32 MiB.
    v7x:      64 MiB VMEM -> limit ~48 MiB, tile budget 16 MiB.
    """
    try:
        cap = int(getattr(pltpu.get_tpu_info(), "vmem_capacity_bytes", 128 << 20))
    except Exception:  # non-TPU tracing fallback
        cap = 128 << 20
    vmem_limit = min((cap * 3) // 4, 100 << 20)
    tile_budget = min(max(cap // 4, 8 << 20), 32 << 20)
    return vmem_limit, tile_budget


def _pick_tile_n(N: int, c_cols: int, itemsize: int, sublane: int,
                 budget: int, *, extra_row_bytes: int = 0,
                 max_tile: int = 1024) -> int:
    """Largest row tile (multiple of `sublane`, <= max_tile) whose
    double-buffered working set fits `budget`, capped so the grid has >= 2
    steps (so the 'parallel' axis can shard across both v7x TensorCores)."""
    c_pad = _round_up(max(c_cols, 1), 128)
    bytes_per_row = 2 * c_pad * itemsize      # double-buffered input block
    bytes_per_row += 2 * c_pad * 4            # f32 upcast + one live f32 temp
    bytes_per_row += 2 * 2 * 128 * 4          # lane-padded (tile,1) tgt/out, dbl-buffered
    bytes_per_row += extra_row_bytes
    tile = (budget // bytes_per_row) // sublane * sublane
    tile = max(sublane, min(max_tile, tile))
    # Keep >= 2 grid steps when N allows it (megacore); harmless on 1-TC chips.
    tile = min(tile, max(sublane, _round_up(pl.cdiv(N, 2), sublane)))
    return tile


def _ls_ce_kernel(x_ref, tgt_ref, out_ref, *, smoothing: float,
                  num_classes: int):
    # x_ref:   (TN, C)  float   (classes on the lane axis)
    # tgt_ref: (TN, 1)  int32
    # out_ref: (TN, 1)  float32
    confidence = 1.0 - smoothing

    x = x_ref[...].astype(jnp.float32)                              # (TN, C)
    tgt = tgt_ref[...]                                              # (TN, 1)

    m = jnp.max(x, axis=-1, keepdims=True)                          # (TN, 1)
    lse = jnp.log(jnp.sum(jnp.exp(x - m), axis=-1, keepdims=True))  # (TN, 1)

    # Fused weighted reduction: sum_j x_j * (smoothing/C + conf * [j == tgt])
    col = jax.lax.broadcasted_iota(jnp.int32, x.shape, 1)           # (TN, C)
    w = smoothing / num_classes + confidence * (col == tgt).astype(jnp.float32)
    xw = jnp.sum(x * w, axis=-1, keepdims=True)                     # (TN, 1)

    out_ref[...] = (m + lse) - xw


def _ls_ce_csplit_kernel(x_ref, tgt_ref, out_ref, m_sc, l_sc, s_sc, *,
                         smoothing: float, num_classes: int, tile_c: int):
    # Online-softmax over a class-split grid axis (axis 1, "arbitrary").
    # x_ref:   (TN, TC)  float
    # tgt_ref: (TN, 1)   int32
    # out_ref: (TN, 1)   float32
    # m_sc/l_sc/s_sc: (TN, 1) float32 running max / sum-exp / weighted-sum.
    k = pl.program_id(1)
    confidence = 1.0 - smoothing

    @pl.when(k == 0)
    def _():
        m_sc[...] = jnp.full_like(m_sc, -jnp.inf)
        l_sc[...] = jnp.zeros_like(l_sc)
        s_sc[...] = jnp.zeros_like(s_sc)

    x = x_ref[...].astype(jnp.float32)                              # (TN, TC)
    tgt = tgt_ref[...]                                              # (TN, 1)

    col = k * tile_c + jax.lax.broadcasted_iota(jnp.int32, x.shape, 1)
    valid = col < num_classes                                       # mask lane tail

    x_masked = jnp.where(valid, x, -jnp.inf)
    m_prev = m_sc[...]
    m_new = jnp.maximum(m_prev, jnp.max(x_masked, axis=-1, keepdims=True))
    l_sc[...] = jnp.exp(m_prev - m_new) * l_sc[...] + jnp.sum(
        jnp.exp(x_masked - m_new), axis=-1, keepdims=True)

    w = jnp.where(
        valid,
        smoothing / num_classes + confidence * (col == tgt).astype(jnp.float32),
        0.0)
    x_safe = jnp.where(valid, x, 0.0)   # keep garbage lanes out of the sum
    s_sc[...] = s_sc[...] + jnp.sum(x_safe * w, axis=-1, keepdims=True)
    m_sc[...] = m_new

    @pl.when(k == pl.num_programs(1) - 1)
    def _():
        out_ref[...] = m_sc[...] + jnp.log(l_sc[...]) - s_sc[...]


def label_smoothing_cross_entropy(x, target, *, smoothing: float = 0.1,
                                  tile_n: int | None = None,
                                  tile_c: int | None = None):
    """Per-sample label-smoothed NLL loss. x: (N, C) float, target: (N,) int."""
    assert smoothing < 1.0
    N, C = x.shape
    itemsize = x.dtype.itemsize
    sublane = {1: 32, 2: 16, 4: 8}.get(itemsize, 8)
    vmem_limit, budget = _vmem_config()

    tgt2d = target.astype(jnp.int32).reshape(N, 1)

    # Decide whether to split the class axis (online softmax) -- only needed
    # when C is so large that a single-axis row tile would be tiny.
    use_split = False
    if tile_c is not None:
        tile_c = _round_up(tile_c, 128)
        use_split = tile_c < C
    elif C > 2048 and _pick_tile_n(N, C, itemsize, sublane, budget) < 256:
        tile_c = 2048
        use_split = True

    scratch_row_bytes = 3 * 128 * 4  # three lane-padded f32 accumulators / row
    if tile_n is None:
        tile_n = _pick_tile_n(
            N, tile_c if use_split else C, itemsize, sublane, budget,
            extra_row_bytes=scratch_row_bytes if use_split else 0)
    assert tile_n % sublane == 0, (
        f"tile_n must be a multiple of {sublane} for dtype {x.dtype}")

    grid_n = pl.cdiv(N, tile_n)
    cost = pl.CostEstimate(
        flops=6 * N * C,
        transcendentals=N * C,
        bytes_accessed=N * C * itemsize + 2 * N * 4,
    )
    compiler_params = pltpu.CompilerParams(
        dimension_semantics=("parallel", "arbitrary") if use_split
        else ("parallel",),
        vmem_limit_bytes=vmem_limit,
    )

    if use_split:
        grid_c = pl.cdiv(C, tile_c)
        kernel = functools.partial(_ls_ce_csplit_kernel, smoothing=smoothing,
                                   num_classes=C, tile_c=tile_c)
        grid_spec = pltpu.PrefetchScalarGridSpec(
            num_scalar_prefetch=0,
            grid=(grid_n, grid_c),
            in_specs=[
                pl.BlockSpec((tile_n, tile_c), lambda i, k: (i, k)),
                pl.BlockSpec((tile_n, 1), lambda i, k: (i, 0)),
            ],
            out_specs=pl.BlockSpec((tile_n, 1), lambda i, k: (i, 0)),
            scratch_shapes=[pltpu.VMEM((tile_n, 1), jnp.float32)] * 3,
        )
    else:
        kernel = functools.partial(_ls_ce_kernel, smoothing=smoothing,
                                   num_classes=C)
        grid_spec = pltpu.PrefetchScalarGridSpec(
            num_scalar_prefetch=0,
            grid=(grid_n,),
            in_specs=[
                pl.BlockSpec((tile_n, C), lambda i: (i, 0)),
                pl.BlockSpec((tile_n, 1), lambda i: (i, 0)),
            ],
            out_specs=pl.BlockSpec((tile_n, 1), lambda i: (i, 0)),
        )

    out = pl.pallas_call(
        kernel,
        out_shape=jax.ShapeDtypeStruct((N, 1), jnp.float32),
        grid_spec=grid_spec,
        compiler_params=compiler_params,
        cost_estimate=cost,
    )(x, tgt2d)

    return out[:, 0]


def _reference(x, target, smoothing=0.1):
    logprobs = jax.nn.log_softmax(x.astype(jnp.float32), axis=-1)
    nll = -jnp.take_along_axis(logprobs, target[:, None].astype(jnp.int32),
                               axis=-1)[:, 0]
    smooth = -jnp.mean(logprobs, axis=-1)
    return (1.0 - smoothing) * nll + smoothing * smooth


if __name__ == "__main__":
    key = jax.random.PRNGKey(0)
    k_x, k_t = jax.random.split(key)
    smoothing = 0.1

    # 1) Small classification-style shapes (single-axis path, 2 grid steps).
    N, C = 16, 40
    x = jax.random.normal(k_x, (N, C), dtype=jnp.float32)
    target = jax.random.randint(k_t, (N,), 0, C, dtype=jnp.int32)
    loss = jax.block_until_ready(
        label_smoothing_cross_entropy(x, target, smoothing=smoothing))
    assert loss.shape == (N,)
    assert jnp.allclose(loss, _reference(x, target, smoothing),
                        atol=1e-5, rtol=1e-5)

    # 2) Ragged batch (N % tile_n != 0): exercises the no-pad masked-tail path.
    N2 = 37
    x2 = jax.random.normal(k_x, (N2, C), dtype=jnp.float32)
    t2 = jax.random.randint(k_t, (N2,), 0, C, dtype=jnp.int32)
    loss2 = jax.block_until_ready(
        label_smoothing_cross_entropy(x2, t2, smoothing=smoothing))
    assert jnp.allclose(loss2, _reference(x2, t2, smoothing),
                        atol=1e-5, rtol=1e-5)

    # 3) Class-split (online-softmax) path with a ragged class tail.
    N3, C3 = 24, 300
    x3 = jax.random.normal(k_x, (N3, C3), dtype=jnp.float32)
    t3 = jax.random.randint(k_t, (N3,), 0, C3, dtype=jnp.int32)
    loss3 = jax.block_until_ready(
        label_smoothing_cross_entropy(x3, t3, smoothing=smoothing,
                                      tile_n=8, tile_c=128))
    assert jnp.allclose(loss3, _reference(x3, t3, smoothing),
                        atol=1e-5, rtol=1e-5)

    # 4) bf16 logits (16-sublane tiling, in-kernel f32 upcast).
    N4, C4 = 32, 256
    x4 = jax.random.normal(k_x, (N4, C4), dtype=jnp.float32).astype(jnp.bfloat16)
    t4 = jax.random.randint(k_t, (N4,), 0, C4, dtype=jnp.int32)
    loss4 = jax.block_until_ready(
        label_smoothing_cross_entropy(x4, t4, smoothing=smoothing))
    assert jnp.allclose(loss4, _reference(x4, t4, smoothing),
                        atol=1e-4, rtol=1e-4)

    print("KERNEL_OK")
</pallas_src>

<mosaic_0001>
module attributes {stable_mosaic.version = 11 : i64} {
  func.func @_ls_ce_kernel(%arg0: i32, %arg1: memref<8x40xf32, #tpu.memory_space<vmem>>, %arg2: memref<8x1xi32, #tpu.memory_space<vmem>>, %arg3: memref<8x1xf32, #tpu.memory_space<vmem>>) attributes {dimension_semantics = [#tpu.dimension_semantics<parallel>], iteration_bounds = array<i64: 2>, scalar_prefetch = 0 : i64, scratch_operands = 0 : i64, tpu.core_type = #tpu.core_type<tc>, window_params = [{transform_indices = @transform_0, window_bounds = array<i64: 8, 40>}, {transform_indices = @transform_1, window_bounds = array<i64: 8, 1>}, {transform_indices = @transform_2, window_bounds = array<i64: 8, 1>}]} {
    %c0 = arith.constant 0 : index
    %c0_0 = arith.constant 0 : index
    %0 = vector.load %arg1[%c0, %c0_0] : memref<8x40xf32, #tpu.memory_space<vmem>>, vector<8x40xf32>
    %c0_1 = arith.constant 0 : index
    %c0_2 = arith.constant 0 : index
    %1 = vector.load %arg2[%c0_1, %c0_2] : memref<8x1xi32, #tpu.memory_space<vmem>>, vector<8x1xi32>
    %cst = arith.constant dense<0xFF800000> : vector<8xf32>
    %2 = vector.multi_reduction <maximumf>, %0, %cst [1] : vector<8x40xf32> to vector<8xf32>
    %3 = vector.shape_cast %2 : vector<8xf32> to vector<8x1xf32>
    %4 = vector.broadcast %3 : vector<8x1xf32> to vector<8x40xf32>
    %5 = arith.subf %0, %4 : vector<8x40xf32>
    %6 = math.exp %5 : vector<8x40xf32>
    %cst_3 = arith.constant dense<0.000000e+00> : vector<8xf32>
    %7 = vector.multi_reduction <add>, %6, %cst_3 [1] : vector<8x40xf32> to vector<8xf32>
    %8 = vector.shape_cast %7 : vector<8xf32> to vector<8x1xf32>
    %9 = math.log %8 : vector<8x1xf32>
    %10 = tpu.iota {dimensions = array<i32: 1>} : vector<8x40xi32>
    %11 = vector.broadcast %1 : vector<8x1xi32> to vector<8x40xi32>
    %12 = arith.cmpi eq, %10, %11 : vector<8x40xi32>
    %13 = arith.extui %12 : vector<8x40xi1> to vector<8x40xi32>
    %14 = arith.sitofp %13 : vector<8x40xi32> to vector<8x40xf32>
    %cst_4 = arith.constant 0.899999976 : f32
    %15 = vector.broadcast %cst_4 : f32 to vector<8x40xf32>
    %16 = arith.mulf %15, %14 : vector<8x40xf32>
    %cst_5 = arith.constant 2.500000e-03 : f32
    %17 = vector.broadcast %cst_5 : f32 to vector<8x40xf32>
    %18 = arith.addf %17, %16 : vector<8x40xf32>
    %19 = arith.mulf %0, %18 : vector<8x40xf32>
    %cst_6 = arith.constant dense<0.000000e+00> : vector<8xf32>
    %20 = vector.multi_reduction <add>, %19, %cst_6 [1] : vector<8x40xf32> to vector<8xf32>
    %21 = vector.shape_cast %20 : vector<8xf32> to vector<8x1xf32>
    %22 = arith.addf %3, %9 : vector<8x1xf32>
    %23 = arith.subf %22, %21 : vector<8x1xf32>
    %c0_7 = arith.constant 0 : index
    %c0_8 = arith.constant 0 : index
    %24 = vector.load %arg3[%c0_7, %c0_8] : memref<8x1xf32, #tpu.memory_space<vmem>>, vector<8x1xf32>
    tpu.vector_store %arg3[%c0_7, %c0_8], %23 {strides = array<i32>} : memref<8x1xf32, #tpu.memory_space<vmem>>, vector<8x1xf32>,
    return
  }
  func.func @transform_0(%arg0: i32) -> (i32, i32) {
    %c0_i32 = arith.constant 0 : i32
    %c0_i32_0 = arith.constant 0 : i32
    return %arg0, %c0_i32 : i32, i32
  }
  func.func @transform_1(%arg0: i32) -> (i32, i32) {
    %c0_i32 = arith.constant 0 : i32
    %c0_i32_0 = arith.constant 0 : i32
    return %arg0, %c0_i32 : i32, i32
  }
  func.func @transform_2(%arg0: i32) -> (i32, i32) {
    %c0_i32 = arith.constant 0 : i32
    %c0_i32_0 = arith.constant 0 : i32
    return %arg0, %c0_i32 : i32, i32
  }
}

</mosaic_0001>

<llo_original>
// kernel: tpu_custom_call.1
$region0: #{tpu_custom_call.1}
  #allocation0 [shape = 'u32[]', space=smem, size = 0x4, offset = 0x4, fixed_abs, tag = 'smem constant byte address 0x4 - core index']
  #allocation1 [shape = 'u32[144,128]{1,0:T(1,128)}', space=vmem, size = 0x12000, scoped, tag = 'internal scratch']
  %s0 = inlined_call_operand.vmem [shape: f32[16,40], index: 0, kind: input, shape index: {}]
  %s1 = inlined_call_operand.vmem [shape: s32[16,1], index: 1, kind: input, shape index: {}]
  %s2 = inlined_call_operand.vmem [shape: f32[16,1], index: 2, kind: output, shape index: {}]
  %s3 = sld [smem:[#allocation0]]
  $region41: #{tpu_custom_call.1} parent=0
    _
  %s5 = ssub.s32 1, %s3
  %s6 = scalar_select 0, %s5, %s3
  loop: start=0, step=1, limit=4
  $region2: #{tpu_custom_call.1} parent=0 // loop_pre_header
    _
  $region3: #{tpu_custom_call.1} parent=0 // loop_header
    %s8 = sphi 0, %s12
    %p9 = scmp.ge.s32.totalorder %s8, 4
    %s18 = sphi 0, %s20
    %s21 = sphi 0, %s18
    %s22 = sphi 0, %s21
    %s38 = sphi 0, %s22
    %s44 = sphi 0, %s46
    %s47 = sphi 0, %s44
    %s48 = sphi 0, %s47
    %s64 = sphi 0, %s48
    %s70 = sphi 0, %s72
    %s73 = sphi 0, %s70
    %s74 = sphi 0, %s73
    %s90 = sphi 0, %s74
  $region4: #{tpu_custom_call.1} parent=0 // loop_header_branch
    %11 = sbr.rel (%p9) target = $region8
  $region5: #{tpu_custom_call.1} parent=0 // loop_body
    %s13 = ssub.s32 %s8, 1
    %s14 = ssub.s32 %s8, 2
    %s15 = sadd.s32 %s8, 1
    %s16 = ssub.s32 %s8, %s15
    %p17 = scmp.eq.s32.totalorder %s16, 0
    %s19 = sadd.s32 %s18, 1
    %s20 = scalar_select %p17, %s18, %s19
    %p23 = pneg %p17
    %p24 = scmp.eq.s32.totalorder %s8, 1
    %p25 = por %p23, %p24
    %p26 = scmp.ne.s32.totalorder %s18, %s21
    %p27 = scmp.eq.s32.totalorder %s8, 0
    %p28 = por %p26, %p27
    %p29 = scmp.ne.s32.totalorder %s18, %s21
    %p30 = scmp.eq.s32.totalorder %s13, 1
    %p31 = por %p29, %p30
    %p32 = scmp.ne.s32.totalorder %s21, %s22
    %p33 = scmp.eq.s32.totalorder %s13, 0
    %p34 = por %p32, %p33
    %p35 = scmp.ne.s32.totalorder %s21, %s22
    %p36 = scmp.eq.s32.totalorder %s14, 1
    %p37 = por %p35, %p36
    %p39 = scmp.ne.s32.totalorder %s22, %s38
    %p40 = scmp.eq.s32.totalorder %s14, 0
    %p41 = por %p39, %p40
    %s42 = ssub.s32 %s8, %s15
    %p43 = scmp.eq.s32.totalorder %s42, 0
    %s45 = sadd.s32 %s44, 1
    %s46 = scalar_select %p43, %s44, %s45
    %p49 = pneg %p43
    %p50 = scmp.eq.s32.totalorder %s8, 1
    %p51 = por %p49, %p50
    %p52 = scmp.ne.s32.totalorder %s44, %s47
    %p53 = scmp.eq.s32.totalorder %s8, 0
    %p54 = por %p52, %p53
    %p55 = scmp.ne.s32.totalorder %s44, %s47
    %p56 = scmp.eq.s32.totalorder %s13, 1
    %p57 = por %p55, %p56
    %p58 = scmp.ne.s32.totalorder %s47, %s48
    %p59 = scmp.eq.s32.totalorder %s13, 0
    %p60 = por %p58, %p59
    %p61 = scmp.ne.s32.totalorder %s47, %s48
    %p62 = scmp.eq.s32.totalorder %s14, 1
    %p63 = por %p61, %p62
    %p65 = scmp.ne.s32.totalorder %s48, %s64
    %p66 = scmp.eq.s32.totalorder %s14, 0
    %p67 = por %p65, %p66
    %s68 = ssub.s32 %s8, %s15
    %p69 = scmp.eq.s32.totalorder %s68, 0
    %s71 = sadd.s32 %s70, 1
    %s72 = scalar_select %p69, %s70, %s71
    %p75 = pneg %p69
    %p76 = scmp.eq.s32.totalorder %s8, 1
    %p77 = por %p75, %p76
    %p78 = scmp.ne.s32.totalorder %s70, %s73
    %p79 = scmp.eq.s32.totalorder %s8, 0
    %p80 = por %p78, %p79
    %p81 = scmp.ne.s32.totalorder %s70, %s73
    %p82 = scmp.eq.s32.totalorder %s13, 1
    %p83 = por %p81, %p82
    %p84 = scmp.ne.s32.totalorder %s73, %s74
    %p85 = scmp.eq.s32.totalorder %s13, 0
    %p86 = por %p84, %p85
    %p87 = scmp.ne.s32.totalorder %s73, %s74
    %p88 = scmp.eq.s32.totalorder %s14, 1
    %p89 = por %p87, %p88
    %p91 = scmp.ne.s32.totalorder %s74, %s90
    %p92 = scmp.eq.s32.totalorder %s14, 0
    %p93 = por %p91, %p92
    %p94 = scmp.le.s32.totalorder 1, %s8
    %p95 = scmp.lt.s32.totalorder %s8, 3
    %p96 = pnand %p94, %p95
    %p97 = pneg %p96
    // Predicated region
    $region9: #{tpu_custom_call.1} parent=5 // pred_check
      _
    $region10: #{tpu_custom_call.1} parent=5 // pred_check_branch
      %99 = sbr.rel (%p96) target = $region12
    $region11: #{tpu_custom_call.1} parent=5 // pred_region
      %s100 = ssub.s32 %s8, 1
    $region12: #{tpu_custom_call.1} parent=5 // pred_fallthru
      _
    %p101 = scmp.lt.s32.totalorder %s8, 2
    // Predicated region
    $region13: #{tpu_custom_call.1} parent=5 // pred_check
      %p102 = pneg %p101
    $region14: #{tpu_custom_call.1} parent=5 // pred_check_branch
      %104 = sbr.rel (%p102) target = $region16
    $region15: #{tpu_custom_call.1} parent=5 // pred_region
      // Predicated region
      $region17: #{tpu_custom_call.1} parent=15 // pred_check
        %p105 = pneg %p28
      $region18: #{tpu_custom_call.1} parent=15 // pred_check_branch
        %107 = sbr.rel (%p105) target = $region20
      $region19: #{tpu_custom_call.1} parent=15 // pred_region
        %p108 = scmp.lt.s32.totalorder %s8, 1
        %s109 = scalar_select %p108, %s8, 1
        %s110 = smul.addr %s109, 8
        %s111 = scalar_lea.vmem %s0, %s110
      $region20: #{tpu_custom_call.1} parent=15 // pred_fallthru
        _
      // Predicated region
      $region21: #{tpu_custom_call.1} parent=15 // pred_check
        %p112 = pneg %p54
      $region22: #{tpu_custom_call.1} parent=15 // pred_check_branch
        %114 = sbr.rel (%p112) target = $region24
      $region23: #{tpu_custom_call.1} parent=15 // pred_region
        %p115 = scmp.lt.s32.totalorder %s8, 1
        %s116 = scalar_select %p115, %s8, 1
        %s117 = smul.addr %s116, 8
        %s118 = scalar_lea.vmem %s1, %s117
      $region24: #{tpu_custom_call.1} parent=15 // pred_fallthru
        _
    $region16: #{tpu_custom_call.1} parent=5 // pred_fallthru
      _
    %p119 = scmp.le.s32.totalorder 1, %s8
    %p120 = scmp.lt.s32.totalorder %s8, 3
    %p121 = pnand %p119, %p120
    %p122 = pneg %p121
    // Predicated region
    $region25: #{tpu_custom_call.1} parent=5 // pred_check
      _
    $region26: #{tpu_custom_call.1} parent=5 // pred_check_branch
      %124 = sbr.rel (%p121) target = $region28
    $region27: #{tpu_custom_call.1} parent=5 // pred_region
      %s125 = ssub.s32 %s8, 1
      %p126 = scmp.lt.s32.totalorder %s13, 1
      %s127 = scalar_select %p126, %s13, 1
      %s128 = smul.addr %s127, 8
      %s129 = scalar_lea.vmem %s0, %s128
      %p130 = pneg %p34
      %p131 = pneg %p31
      %p132 = scmp.lt.s32.totalorder %s13, 1
      %s133 = scalar_select %p132, %s13, 1
      %s134 = smul.addr %s133, 8
      %s135 = scalar_lea.vmem %s1, %s134
      %p136 = pneg %p60
      %p137 = pneg %p57
      %p138 = pneg %p86
      %p139 = pneg %p83
      %p140 = scmp.lt.s32.totalorder %s13, 1
      %s141 = scalar_select %p140, %s13, 1
      %s142 = smul.addr %s141, 8
      %s143 = scalar_lea.vmem %s2, %s142
      %p144 = scmp.lt.s32.totalorder %s13, 1
      %s145 = scalar_select %p144, %s13, 1
      %s146 = smul.addr %s145, 8
      %s147 = scalar_lea.vmem %s0, %s146
      %p148 = scmp.lt.s32.totalorder %s13, 1
      %s149 = scalar_select %p148, %s13, 1
      %s150 = smul.addr %s149, 8
      %s151 = scalar_lea.vmem %s1, %s150
      %p152 = scmp.lt.s32.totalorder %s13, 1
      %s153 = scalar_select %p152, %s13, 1
      %s154 = smul.addr %s153, 8
      %s155 = scalar_lea.vmem %s2, %s154
      %v156 = vld [vmem:[%s147] sm:$0xff]
      %v157 = vld [vmem:[%s151] sm:$0xff]
      %vm158 = vcmask 326656
      %v159 = vsel %vm158, %v156, -inf
      %160 = vmax.xlane.f32.xlu0 %v159
      %v161 = vpop.xlane.xlu0 %160
      %v162 = vsub.f32 %v156, %v161
      %v163 = vmul.f32 %v162, 1.442695
      %v164 = vpow.pop %v163
      %v165 = vsel %vm158, %v164, 0.0
      %166 = vadd.xlane.f32.xlu0 %v165
      %v167 = vpop.xlane.xlu0 %166
      %v168 = vlog2.pop %v167
      %v169 = vmul.f32 %v168, 0.6931472
      %v170 = vlaneseq
      %v171 = vand.u32 %v170, 127
      %172 = vset.pattern.permute.xlu0 0
      %173 = vperm.xlu0 %172, %v157
      %v174 = vpop.permute.xlu0 %173
      %vm175 = vcmp.eq.s32.totalorder %v171, %v174
      %v176 = vsel %vm175, 1, 0
      %v177 = vcvt.s32.f32 %v176
      %v178 = vmul.f32 %v177, 0.9
      %v179 = vadd.f32 %v178, 0.0025
      %v180 = vmul.f32 %v156, %v179
      %v181 = vsel %vm158, %v180, 0.0
      %182 = vadd.xlane.f32.xlu0 %v181
      %v183 = vpop.xlane.xlu0 %182
      %v184 = vadd.f32 %v161, %v169
      %v185 = vsub.f32 %v184, %v183
      %vm186 = vcmask 7168
      %187 = vst.msk [vmem:[%s155] sm:$0xff] %vm186, %v185
      %p188 = scmp.lt.s32.totalorder %s13, 1
      %s189 = scalar_select %p188, %s13, 1
      %s190 = smul.addr %s189, 8
      %s191 = scalar_lea.vmem %s2, %s190
      // Predicated region
      $region29: #{tpu_custom_call.1} parent=27 // pred_check
        %p192 = pneg %p83
      $region30: #{tpu_custom_call.1} parent=27 // pred_check_branch
        %194 = sbr.rel (%p192) target = $region32
      $region31: #{tpu_custom_call.1} parent=27 // pred_region
        _
      $region32: #{tpu_custom_call.1} parent=27 // pred_fallthru
        _
    $region28: #{tpu_custom_call.1} parent=5 // pred_fallthru
      _
    %p195 = scmp.le.s32.totalorder 2, %s8
    // Predicated region
    $region33: #{tpu_custom_call.1} parent=5 // pred_check
      %p196 = pneg %p195
    $region34: #{tpu_custom_call.1} parent=5 // pred_check_branch
      %198 = sbr.rel (%p196) target = $region36
    $region35: #{tpu_custom_call.1} parent=5 // pred_region
      %s199 = ssub.s32 %s8, 2
      // Predicated region
      $region37: #{tpu_custom_call.1} parent=35 // pred_check
        %p200 = pneg %p89
      $region38: #{tpu_custom_call.1} parent=35 // pred_check_branch
        %202 = sbr.rel (%p200) target = $region40
      $region39: #{tpu_custom_call.1} parent=35 // pred_region
        %p203 = scmp.lt.s32.totalorder %s14, 1
        %s204 = scalar_select %p203, %s14, 1
        %s205 = smul.addr %s204, 8
        %s206 = scalar_lea.vmem %s2, %s205
      $region40: #{tpu_custom_call.1} parent=35 // pred_fallthru
        _
    $region36: #{tpu_custom_call.1} parent=5 // pred_fallthru
      _
  $region6: #{tpu_custom_call.1} parent=0 // loop_footer
    %s12 = sadd.s32 1, %s8
  $region7: #{tpu_custom_call.1} parent=0 // loop_footer_branch
    %7 = sbr.rel target = $region3
  $region8: #{tpu_custom_call.1} parent=0 // loop_exit
    _

</llo_original>
